<compile_context>
chip_gen: v6e
topology: v6e:2x2x1
jax: 0.10.0
libtpu: 0.0.40
codegen_flags: <defaults>
</compile_context>

<pallas_src>
import jax
import jax.numpy as jnp
from jax.experimental import pallas as pl
from jax.experimental.pallas import tpu as pltpu


# ----------------------------------------------------------------------------
# Deterministic parameter initialization (mirrors __init__, unused by forward)
# ----------------------------------------------------------------------------
def init_params(key, n_heads, state_dim, obs_dim, embed_dim, hypernet_embed,
                nonlinear=False, weighted_head=True, state_bias=True):
    params = {"selector_extractors": [], "key_extractors": []}
    keys = jax.random.split(key, 4 * n_heads + 8)
    ki = 0

    def dense(k, fan_in, fan_out, bias=True):
        lim = 1.0 / jnp.sqrt(fan_in)
        w = jax.random.uniform(k, (fan_out, fan_in), jnp.float32, -lim, lim)
        b = jnp.zeros((fan_out,), jnp.float32) if bias else None
        return {"w": w, "b": b}

    for _ in range(n_heads):
        sel = {
            "fc1": dense(keys[ki], state_dim, hypernet_embed),
            "fc2": dense(keys[ki + 1], hypernet_embed, embed_dim, bias=False),
        }
        ki += 2
        params["selector_extractors"].append(sel)
        key_in = obs_dim + 1 if nonlinear else obs_dim
        params["key_extractors"].append(
            dense(keys[ki], key_in, embed_dim, bias=False))
        ki += 1

    if weighted_head:
        params["hyper_w_head"] = {
            "fc1": dense(keys[ki], state_dim, hypernet_embed),
            "fc2": dense(keys[ki + 1], hypernet_embed, n_heads),
        }
        ki += 2
    if state_bias:
        params["V"] = {
            "fc1": dense(keys[ki], state_dim, embed_dim),
            "fc2": dense(keys[ki + 1], embed_dim, 1),
        }
        ki += 2
    return params


# ----------------------------------------------------------------------------
# Pallas kernel: identity pass-through (the module's entire forward)
# ----------------------------------------------------------------------------
def _identity_kernel(x_ref, o_ref):
    o_ref[...] = x_ref[...]


_LANES = 128
_SUBLANES = 8
_TARGET_BLOCK_BYTES = 2 << 20  # ~2 MiB per block; 4 bufs => ~8 MiB VMEM


def _choose_tile_rows(rows, bytes_per_row):
    """Tile rows: multiple of 8, block <= ~2 MiB, and not larger than rows."""
    target_rows = max(_SUBLANES, _TARGET_BLOCK_BYTES // bytes_per_row)
    target_rows = (target_rows // _SUBLANES) * _SUBLANES
    tile_rows = min(target_rows, ((rows + _SUBLANES - 1) // _SUBLANES) * _SUBLANES)
    return max(_SUBLANES, tile_rows)


def multi_head_attention_forward(x):
    """Pallas implementation of MultiHeadAttention.forward: returns x unchanged.

    The tensor is flattened to a lane-dense (rows, 128) slab, padded so rows is
    a multiple of the tile height, copied through a large-tile pipelined Pallas
    kernel, and reshaped back to the original shape.
    """
    # TODO(synk): the genuinely optimal implementation is `return x`; the copy
    # kernel below exists only to exercise a correct, roofline-bound Pallas path.
    orig_shape = x.shape
    orig_dtype = x.dtype
    total = x.size

    flat = x.reshape(-1)
    # Pad to a full number of 128-lane rows.
    pad_lane = (-total) % _LANES
    if pad_lane:
        flat = jnp.pad(flat, (0, pad_lane))
    rows = flat.size // _LANES

    bytes_per_row = _LANES * jnp.dtype(orig_dtype).itemsize
    tile_rows = _choose_tile_rows(rows, bytes_per_row)

    # Pad rows up to a multiple of tile_rows so every block is full-size
    # (unmasked vst, uniform pipeline, no degenerate remainder block).
    padded_rows = ((rows + tile_rows - 1) // tile_rows) * tile_rows
    pad_rows = padded_rows - rows
    x2d = flat.reshape(rows, _LANES)
    if pad_rows:
        x2d = jnp.pad(x2d, ((0, pad_rows), (0, 0)))

    grid = (padded_rows // tile_rows,)
    block_bytes = tile_rows * bytes_per_row

    out2d = pl.pallas_call(
        _identity_kernel,
        out_shape=jax.ShapeDtypeStruct((padded_rows, _LANES), orig_dtype),
        grid_spec=pl.GridSpec(
            grid=grid,
            in_specs=[pl.BlockSpec((tile_rows, _LANES), lambda i: (i, 0))],
            out_specs=pl.BlockSpec((tile_rows, _LANES), lambda i: (i, 0)),
        ),
        compiler_params=pltpu.CompilerParams(
            dimension_semantics=("parallel",),
            # in + out, double-buffered, plus headroom; safe on v5e/v6e/v7x.
            vmem_limit_bytes=min(32 << 20,
                                 max(4 * block_bytes + (2 << 20), 4 << 20)),
        ),
        cost_estimate=pl.CostEstimate(
            flops=0, transcendentals=0, bytes_accessed=2 * x2d.size * bytes_per_row // _LANES),
    )(x2d)

    out = out2d.reshape(-1)
    if pad_rows or pad_lane:
        out = out[:total]
    return out.reshape(orig_shape)


# ----------------------------------------------------------------------------
# Driver
# ----------------------------------------------------------------------------
if __name__ == "__main__":
    key = jax.random.PRNGKey(0)
    kx, kp = jax.random.split(key)

    # Small, module-consistent sizes.
    n_heads = 4
    state_dim = 32
    obs_dim = 16
    embed_dim = 32
    hypernet_embed = 64

    # Parameters exist in the module but are not used by forward().
    _params = init_params(kp, n_heads, state_dim, obs_dim, embed_dim,
                          hypernet_embed, nonlinear=False,
                          weighted_head=True, state_bias=True)

    # Example input (forward accepts any x and returns it unchanged).
    x = jax.random.normal(kx, (2, 4, 16, 16), dtype=jnp.float32)

    fwd = jax.jit(multi_head_attention_forward)
    y = fwd(x)
    y = jax.block_until_ready(y)

    assert y.shape == x.shape and y.dtype == x.dtype
    assert bool(jnp.allclose(y, x)), "identity forward mismatch"
    print("KERNEL_OK")
</pallas_src>

<mosaic_0001>
module attributes {stable_mosaic.version = 11 : i64} {
  func.func @_identity_kernel(%arg0: i32, %arg1: memref<16x128xf32, #tpu.memory_space<vmem>>, %arg2: memref<16x128xf32, #tpu.memory_space<vmem>>) attributes {dimension_semantics = [#tpu.dimension_semantics<parallel>], iteration_bounds = array<i64: 1>, scalar_prefetch = 0 : i64, scratch_operands = 0 : i64, tpu.core_type = #tpu.core_type<tc>, window_params = [{transform_indices = @transform_0, window_bounds = array<i64: 16, 128>}, {transform_indices = @transform_1, window_bounds = array<i64: 16, 128>}]} {
    %c0 = arith.constant 0 : index
    %c0_0 = arith.constant 0 : index
    %0 = vector.load %arg1[%c0, %c0_0] : memref<16x128xf32, #tpu.memory_space<vmem>>, vector<16x128xf32>
    %c0_1 = arith.constant 0 : index
    %c0_2 = arith.constant 0 : index
    %1 = vector.load %arg2[%c0_1, %c0_2] : memref<16x128xf32, #tpu.memory_space<vmem>>, vector<16x128xf32>
    tpu.vector_store %arg2[%c0_1, %c0_2], %0 {strides = array<i32>} : memref<16x128xf32, #tpu.memory_space<vmem>>, vector<16x128xf32>,
    return
  }
  func.func @transform_0(%arg0: i32) -> (i32, i32) {
    %c0_i32 = arith.constant 0 : i32
    %c0_i32_0 = arith.constant 0 : i32
    return %arg0, %c0_i32 : i32, i32
  }
  func.func @transform_1(%arg0: i32) -> (i32, i32) {
    %c0_i32 = arith.constant 0 : i32
    %c0_i32_0 = arith.constant 0 : i32
    return %arg0, %c0_i32 : i32, i32
  }
}

</mosaic_0001>

<llo_original>
// kernel: multi_head_attention_forward.1
$region0: #{multi_head_attention_forward.1}
  #allocation0 [shape = 'u32[]', space=smem, size = 0x4, offset = 0x4, fixed_abs, tag = 'smem constant byte address 0x4 - core index']
  #allocation1 [shape = 'u32[144,128]{1,0:T(1,128)}', space=vmem, size = 0x12000, scoped, tag = 'internal scratch']
  %s0 = inlined_call_operand.vmem [shape: f32[16,128], index: 0, kind: input, shape index: {}]
  %s1 = inlined_call_operand.vmem [shape: f32[16,128], index: 1, kind: output, shape index: {}]
  %s2 = sld [smem:[#allocation0]]
  $region14: #{multi_head_attention_forward.1} parent=0
    _
  %s4 = ssub.s32 1, %s2
  %s5 = scalar_select 0, %s4, %s2
  // Predicated region
  $region2: #{multi_head_attention_forward.1} parent=0 // pred_check
    _
  $region3: #{multi_head_attention_forward.1} parent=0 // pred_check_branch
    %7 = sbr.rel (0) target = $region5
  $region4: #{multi_head_attention_forward.1} parent=0 // pred_region
    _
  $region5: #{multi_head_attention_forward.1} parent=0 // pred_fallthru
    _
  %v8 = vld [vmem:[%s0] sm:$0xff]
  %v9 = vld [vmem:[%s0 + $0x8] sm:$0xff]
  %10 = vst [vmem:[%s1] sm:$0xff] %v8
  %11 = vst [vmem:[%s1 + $0x8] sm:$0xff] %v9
  // Predicated region
  $region6: #{multi_head_attention_forward.1} parent=0 // pred_check
    _
  $region7: #{multi_head_attention_forward.1} parent=0 // pred_check_branch
    %13 = sbr.rel (0) target = $region9
  $region8: #{multi_head_attention_forward.1} parent=0 // pred_region
    _
  $region9: #{multi_head_attention_forward.1} parent=0 // pred_fallthru
    _
  // Predicated region
  $region10: #{multi_head_attention_forward.1} parent=0 // pred_check
    _
  $region11: #{multi_head_attention_forward.1} parent=0 // pred_check_branch
    %15 = sbr.rel (0) target = $region13
  $region12: #{multi_head_attention_forward.1} parent=0 // pred_region
    _
  $region13: #{multi_head_attention_forward.1} parent=0 // pred_fallthru
    _

</llo_original>
